<compile_context>
chip_gen: v5e
topology: v5e:2x2
jax: 0.10.0
libtpu: 0.0.40
codegen_flags: <defaults>
</compile_context>

<pallas_src>
import jax
import jax.numpy as jnp
from jax.experimental import pallas as pl
from jax.experimental.pallas import tpu as pltpu


def _round_up(x: int, m: int) -> int:
    return (x + m - 1) // m * m


def _vmem_capacity_bytes() -> int:
    """Physical VMEM per core, with a conservative fallback (v7x = 64 MiB/TC)."""
    try:
        cap = int(pltpu.get_tpu_info().vmem_capacity_bytes)
        if cap > 0:
            return cap
    except Exception:
        pass
    return 64 << 20


def qr_mlp_kernel(x_ref, w1_ref, b1_ref, w2_ref, b2_ref, w3_ref, b3_ref, z_ref):
    """One batch tile of relu(relu(x@W1+b1)@W2+b2)@W3+b3.

    x arrives in f32 and is cast to the weight dtype *inside* the kernel (VPU op,
    hidden under the DMA/MXU); accumulation, bias add and ReLU run in f32.
    """
    # Layer 1: Linear + ReLU
    h1 = jnp.dot(x_ref[...].astype(w1_ref.dtype), w1_ref[...],
                 preferred_element_type=jnp.float32)
    h1 = jnp.maximum(h1 + b1_ref[...], 0.0)

    # Layer 2: Linear + ReLU
    h2 = jnp.dot(h1.astype(w2_ref.dtype), w2_ref[...],
                 preferred_element_type=jnp.float32)
    h2 = jnp.maximum(h2 + b2_ref[...], 0.0)

    # Z head: Linear (no activation). Output lanes are padded to a 128 multiple
    # in prepare_qr_params, so this is an unmasked, lane-dense store.
    z = jnp.dot(h2.astype(w3_ref.dtype), w3_ref[...],
                preferred_element_type=jnp.float32)
    z_ref[...] = (z + b3_ref[...]).astype(z_ref.dtype)


def prepare_qr_params(params, action_dim, quantile_len, *, matmul_dtype=jnp.bfloat16):
    """One-time weight preparation (hoisted out of the forward pass).

    Casts the (in, out)-layout weights to the matmul dtype and zero-pads the
    head's out_features to a 128-lane multiple for unmasked output stores.
    Returns (w1, b1, w2, b2, w3, b3) ready for qr_network_forward.
    """
    w1, b1, w2, b2, w3, b3 = params
    out_features = action_dim * quantile_len
    out_pad = _round_up(out_features, 128)
    if out_pad != out_features:                     # only pad when needed
        w3 = jnp.pad(w3, ((0, 0), (0, out_pad - out_features)))
        b3 = jnp.pad(b3, ((0, 0), (0, out_pad - out_features)))
    w1q, w2q, w3q = (w.astype(matmul_dtype) for w in (w1, w2, w3))
    b1f, b2f, b3f = (jnp.reshape(b, (1, -1)).astype(jnp.float32)
                     for b in (b1, b2, b3))
    return (w1q, b1f, w2q, b2f, w3q, b3f)


def qr_network_forward(state, prepared_params, action_dim, quantile_len,
                       *, tile_batch=None, out_dtype=jnp.float32):
    """state: (B, state_dim) f32. prepared_params from prepare_qr_params.

    Returns Z: (B, action_dim, quantile_len) in out_dtype (default f32).
    out_dtype=jnp.bfloat16 halves the Z HBM writeback (useful on v5e).
    """
    w1q, b1f, w2q, b2f, w3q, b3f = prepared_params
    B, state_dim = state.shape
    hidden_dim = w1q.shape[1]
    out_features = action_dim * quantile_len
    out_pad = w3q.shape[1]                          # already 128-lane padded

    # ---- Batch tiling -------------------------------------------------------
    # Per-grid-step overhead (~0.35 us) dominates at these FLOP counts, so use
    # the largest reasonable tiles; but keep >= 2 grid steps when B > 8 so the
    # "parallel" batch axis can be split across v7x's two TensorCores.
    b8 = _round_up(B, 8)
    if tile_batch is None:
        if b8 <= 8:
            tile_batch = 8
        else:
            tile_batch = min(2048, _round_up((b8 + 1) // 2, 8))
    tile_batch = max(8, _round_up(tile_batch, 8))
    b_pad = _round_up(max(B, tile_batch), tile_batch)
    grid = (b_pad // tile_batch,)

    # Padded batch rows compute garbage that is sliced off afterwards (correct,
    # only wasted work when B is far from a tile_batch multiple).
    x = state if b_pad == B else jnp.pad(state, ((0, b_pad - B), (0, 0)))

    # ---- BlockSpecs ---------------------------------------------------------
    def resident_spec(arr):
        # Whole array as a single block, same block every grid step -> stays in
        # VMEM across the grid (no re-DMA).
        return pl.BlockSpec(arr.shape, lambda i: (0, 0))

    in_specs = [
        pl.BlockSpec((tile_batch, state_dim), lambda i: (i, 0)),   # streamed x tile
        resident_spec(w1q), resident_spec(b1f),
        resident_spec(w2q), resident_spec(b2f),
        resident_spec(w3q), resident_spec(b3f),
    ]
    out_spec = pl.BlockSpec((tile_batch, out_pad), lambda i: (i, 0))

    # ---- Cost estimate (advisory, lets XLA overlap surrounding ops) ---------
    out_itemsize = jnp.dtype(out_dtype).itemsize
    flops = 2 * b_pad * (state_dim * hidden_dim
                         + hidden_dim * hidden_dim
                         + hidden_dim * out_pad)
    bytes_accessed = (x.size * x.dtype.itemsize
                      + sum(a.size * a.dtype.itemsize
                            for a in (w1q, b1f, w2q, b2f, w3q, b3f))
                      + b_pad * out_pad * out_itemsize)
    cost = pl.CostEstimate(flops=flops, transcendentals=0,
                           bytes_accessed=bytes_accessed)

    # ---- VMEM budget ---------------------------------------------------------
    # Resident weight/bias blocks are double-buffered by BlockSpec default, so
    # count them twice.  Streamed x/z tiles are double-buffered too.  Leave
    # ~19% of physical VMEM as headroom for compiler-internal scratch.
    # TODO(synk): switch resident specs to pipeline_mode=pl.Buffered(1) once
    # single-buffered constant blocks are relied on, halving their footprint.
    resident_bytes = 2 * sum(a.size * a.dtype.itemsize
                             for a in (w1q, b1f, w2q, b2f, w3q, b3f))
    stream_bytes = 2 * (tile_batch * state_dim * x.dtype.itemsize
                        + tile_batch * out_pad * out_itemsize)
    act_bytes = 4 * tile_batch * max(hidden_dim, out_pad) * 4
    need = resident_bytes + stream_bytes + act_bytes + (4 << 20)
    cap = _vmem_capacity_bytes() * 13 // 16          # headroom for scratch
    vmem_limit = int(max(min(need, cap), 8 << 20))

    z_pad = pl.pallas_call(
        qr_mlp_kernel,
        out_shape=jax.ShapeDtypeStruct((b_pad, out_pad), out_dtype),
        grid_spec=pltpu.PrefetchScalarGridSpec(
            num_scalar_prefetch=0,
            grid=grid,
            in_specs=in_specs,
            out_specs=out_spec,
        ),
        compiler_params=pltpu.CompilerParams(
            dimension_semantics=("parallel",),       # megacore split on v7x
            vmem_limit_bytes=vmem_limit,
        ),
        cost_estimate=cost,
    )(x, w1q, b1f, w2q, b2f, w3q, b3f)

    # Drop batch/lane padding (fused slice), then match Z.view(-1, A, Q).
    z = z_pad[:B, :out_features].astype(jnp.float32)
    return z.reshape(-1, action_dim, quantile_len)


def init_params(key, state_dim, hidden_dim, action_dim, quantile_len):
    """Deterministic init mirroring nn.Linear default U(-1/sqrt(fan_in), 1/sqrt(fan_in)).
    Weights are stored as (in, out), i.e. already transposed for x @ W."""
    def linear_init(k, fan_in, fan_out):
        kw, kb = jax.random.split(k)
        bound = 1.0 / jnp.sqrt(fan_in)
        w = jax.random.uniform(kw, (fan_in, fan_out), jnp.float32, -bound, bound)
        b = jax.random.uniform(kb, (1, fan_out), jnp.float32, -bound, bound)
        return w, b

    k1, k2, k3 = jax.random.split(key, 3)
    w1, b1 = linear_init(k1, state_dim, hidden_dim)
    w2, b2 = linear_init(k2, hidden_dim, hidden_dim)
    w3, b3 = linear_init(k3, hidden_dim, action_dim * quantile_len)
    return (w1, b1, w2, b2, w3, b3)


if __name__ == "__main__":
    # Small shapes consistent with the module.  batch=64 with the default tile
    # logic gives tile_batch=32 and a 2-step "parallel" grid (both TCs on v7x).
    batch = 64
    state_dim = 16
    hidden_dim = 32
    action_dim = 4
    quantile_len = 8

    key = jax.random.PRNGKey(0)
    k_params, k_state = jax.random.split(key)

    params = init_params(k_params, state_dim, hidden_dim, action_dim, quantile_len)
    state = jax.random.normal(k_state, (batch, state_dim), jnp.float32)

    # One-time weight preparation (bf16 cast + head padding), then forward.
    prepared = prepare_qr_params(params, action_dim, quantile_len)
    Z = qr_network_forward(state, prepared, action_dim, quantile_len)
    Z = jax.block_until_ready(Z)

    # Pure-JAX f32 reference matching the PyTorch module's math exactly.
    w1, b1, w2, b2, w3, b3 = params
    h1 = jnp.maximum(state @ w1 + b1, 0.0)
    h2 = jnp.maximum(h1 @ w2 + b2, 0.0)
    Z_ref = (h2 @ w3 + b3).reshape(-1, action_dim, quantile_len)

    assert Z.shape == (batch, action_dim, quantile_len), Z.shape
    max_err = float(jnp.max(jnp.abs(Z - Z_ref)))
    # Tolerance bounds the bf16-operand / f32-accumulate rounding error.
    assert jnp.allclose(Z, Z_ref, atol=3e-2, rtol=3e-2), max_err
    print("KERNEL_OK")
</pallas_src>

<mosaic_0001>
module attributes {stable_mosaic.version = 11 : i64} {
  func.func @qr_mlp_kernel(%arg0: i32, %arg1: memref<32x16xf32, #tpu.memory_space<vmem>>, %arg2: memref<16x32xbf16, #tpu.memory_space<vmem>>, %arg3: memref<1x32xf32, #tpu.memory_space<vmem>>, %arg4: memref<32x32xbf16, #tpu.memory_space<vmem>>, %arg5: memref<1x32xf32, #tpu.memory_space<vmem>>, %arg6: memref<32x128xbf16, #tpu.memory_space<vmem>>, %arg7: memref<1x128xf32, #tpu.memory_space<vmem>>, %arg8: memref<32x128xf32, #tpu.memory_space<vmem>>) attributes {dimension_semantics = [#tpu.dimension_semantics<parallel>], iteration_bounds = array<i64: 2>, scalar_prefetch = 0 : i64, scratch_operands = 0 : i64, tpu.core_type = #tpu.core_type<tc>, window_params = [{transform_indices = @transform_0, window_bounds = array<i64: 32, 16>}, {pipeline_mode = #tpu.pipeline_mode<synchronous>, transform_indices = @transform_1, window_bounds = array<i64: 16, 32>}, {pipeline_mode = #tpu.pipeline_mode<synchronous>, transform_indices = @transform_2, window_bounds = array<i64: 1, 32>}, {pipeline_mode = #tpu.pipeline_mode<synchronous>, transform_indices = @transform_3, window_bounds = array<i64: 32, 32>}, {pipeline_mode = #tpu.pipeline_mode<synchronous>, transform_indices = @transform_4, window_bounds = array<i64: 1, 32>}, {pipeline_mode = #tpu.pipeline_mode<synchronous>, transform_indices = @transform_5, window_bounds = array<i64: 32, 128>}, {pipeline_mode = #tpu.pipeline_mode<synchronous>, transform_indices = @transform_6, window_bounds = array<i64: 1, 128>}, {transform_indices = @transform_7, window_bounds = array<i64: 32, 128>}]} {
    %c0 = arith.constant 0 : index
    %c0_0 = arith.constant 0 : index
    %0 = vector.load %arg1[%c0, %c0_0] : memref<32x16xf32, #tpu.memory_space<vmem>>, vector<32x16xf32>
    %1 = arith.truncf %0 : vector<32x16xf32> to vector<32x16xbf16>
    %c0_1 = arith.constant 0 : index
    %c0_2 = arith.constant 0 : index
    %2 = vector.load %arg2[%c0_1, %c0_2] : memref<16x32xbf16, #tpu.memory_space<vmem>>, vector<16x32xbf16>
    %cst = arith.constant dense<0.000000e+00> : vector<32x32xf32>
    %3 = tpu.matmul %1, %2, %cst {dimension_numbers = #tpu.dot_dimension_numbers<[1], [0], [0], [1], [0, 0, 1, 1], [], []>} : vector<32x16xbf16>, vector<16x32xbf16>, vector<32x32xf32> -> vector<32x32xf32>
    %c0_3 = arith.constant 0 : index
    %c0_4 = arith.constant 0 : index
    %4 = vector.load %arg3[%c0_3, %c0_4] : memref<1x32xf32, #tpu.memory_space<vmem>>, vector<1x32xf32>
    %5 = vector.broadcast %4 : vector<1x32xf32> to vector<32x32xf32>
    %6 = arith.addf %3, %5 : vector<32x32xf32>
    %cst_5 = arith.constant 0.000000e+00 : f32
    %7 = vector.broadcast %cst_5 : f32 to vector<32x32xf32>
    %8 = arith.maximumf %6, %7 : vector<32x32xf32>
    %9 = arith.truncf %8 : vector<32x32xf32> to vector<32x32xbf16>
    %c0_6 = arith.constant 0 : index
    %c0_7 = arith.constant 0 : index
    %10 = vector.load %arg4[%c0_6, %c0_7] : memref<32x32xbf16, #tpu.memory_space<vmem>>, vector<32x32xbf16>
    %cst_8 = arith.constant dense<0.000000e+00> : vector<32x32xf32>
    %11 = tpu.matmul %9, %10, %cst_8 {dimension_numbers = #tpu.dot_dimension_numbers<[1], [0], [0], [1], [0, 0, 1, 1], [], []>} : vector<32x32xbf16>, vector<32x32xbf16>, vector<32x32xf32> -> vector<32x32xf32>
    %c0_9 = arith.constant 0 : index
    %c0_10 = arith.constant 0 : index
    %12 = vector.load %arg5[%c0_9, %c0_10] : memref<1x32xf32, #tpu.memory_space<vmem>>, vector<1x32xf32>
    %13 = vector.broadcast %12 : vector<1x32xf32> to vector<32x32xf32>
    %14 = arith.addf %11, %13 : vector<32x32xf32>
    %cst_11 = arith.constant 0.000000e+00 : f32
    %15 = vector.broadcast %cst_11 : f32 to vector<32x32xf32>
    %16 = arith.maximumf %14, %15 : vector<32x32xf32>
    %17 = arith.truncf %16 : vector<32x32xf32> to vector<32x32xbf16>
    %c0_12 = arith.constant 0 : index
    %c0_13 = arith.constant 0 : index
    %18 = vector.load %arg6[%c0_12, %c0_13] : memref<32x128xbf16, #tpu.memory_space<vmem>>, vector<32x128xbf16>
    %cst_14 = arith.constant dense<0.000000e+00> : vector<32x128xf32>
    %19 = tpu.matmul %17, %18, %cst_14 {dimension_numbers = #tpu.dot_dimension_numbers<[1], [0], [0], [1], [0, 0, 1, 1], [], []>} : vector<32x32xbf16>, vector<32x128xbf16>, vector<32x128xf32> -> vector<32x128xf32>
    %c0_15 = arith.constant 0 : index
    %c0_16 = arith.constant 0 : index
    %20 = vector.load %arg7[%c0_15, %c0_16] : memref<1x128xf32, #tpu.memory_space<vmem>>, vector<1x128xf32>
    %21 = vector.broadcast %20 : vector<1x128xf32> to vector<32x128xf32>
    %22 = arith.addf %19, %21 : vector<32x128xf32>
    %c0_17 = arith.constant 0 : index
    %c0_18 = arith.constant 0 : index
    %23 = vector.load %arg8[%c0_17, %c0_18] : memref<32x128xf32, #tpu.memory_space<vmem>>, vector<32x128xf32>
    tpu.vector_store %arg8[%c0_17, %c0_18], %22 {strides = array<i32>} : memref<32x128xf32, #tpu.memory_space<vmem>>, vector<32x128xf32>,
    return
  }
  func.func @transform_0(%arg0: i32) -> (i32, i32) {
    %c0_i32 = arith.constant 0 : i32
    %c0_i32_0 = arith.constant 0 : i32
    return %arg0, %c0_i32 : i32, i32
  }
  func.func @transform_1(%arg0: i32) -> (i32, i32) {
    %c0_i32 = arith.constant 0 : i32
    %c0_i32_0 = arith.constant 0 : i32
    %c0_i32_1 = arith.constant 0 : i32
    return %c0_i32, %c0_i32_0 : i32, i32
  }
  func.func @transform_2(%arg0: i32) -> (i32, i32) {
    %c0_i32 = arith.constant 0 : i32
    %c0_i32_0 = arith.constant 0 : i32
    %c0_i32_1 = arith.constant 0 : i32
    return %c0_i32, %c0_i32_0 : i32, i32
  }
  func.func @transform_3(%arg0: i32) -> (i32, i32) {
    %c0_i32 = arith.constant 0 : i32
    %c0_i32_0 = arith.constant 0 : i32
    %c0_i32_1 = arith.constant 0 : i32
    return %c0_i32, %c0_i32_0 : i32, i32
  }
  func.func @transform_4(%arg0: i32) -> (i32, i32) {
    %c0_i32 = arith.constant 0 : i32
    %c0_i32_0 = arith.constant 0 : i32
    %c0_i32_1 = arith.constant 0 : i32
    return %c0_i32, %c0_i32_0 : i32, i32
  }
  func.func @transform_5(%arg0: i32) -> (i32, i32) {
    %c0_i32 = arith.constant 0 : i32
    %c0_i32_0 = arith.constant 0 : i32
    %c0_i32_1 = arith.constant 0 : i32
    return %c0_i32, %c0_i32_0 : i32, i32
  }
  func.func @transform_6(%arg0: i32) -> (i32, i32) {
    %c0_i32 = arith.constant 0 : i32
    %c0_i32_0 = arith.constant 0 : i32
    %c0_i32_1 = arith.constant 0 : i32
    return %c0_i32, %c0_i32_0 : i32, i32
  }
  func.func @transform_7(%arg0: i32) -> (i32, i32) {
    %c0_i32 = arith.constant 0 : i32
    %c0_i32_0 = arith.constant 0 : i32
    return %arg0, %c0_i32 : i32, i32
  }
}

</mosaic_0001>

<llo_original>
// kernel: tpu_custom_call.1
$region0: #{tpu_custom_call.1}
  #allocation0 [shape = 'u32[]', space=smem, size = 0x4, offset = 0x4, fixed_abs, tag = 'smem constant byte address 0x4 - core index']
  #allocation1 [shape = 'u32[72,128]{1,0:T(1,128)}', space=vmem, size = 0x9000, scoped, tag = 'internal scratch']
  %s0 = inlined_call_operand.vmem [shape: f32[64,16], index: 0, kind: input, shape index: {}]
  %s1 = inlined_call_operand.vmem [shape: bf16[16,32], index: 1, kind: input, shape index: {}]
  %s2 = inlined_call_operand.vmem [shape: f32[1,32], index: 2, kind: input, shape index: {}]
  %s3 = inlined_call_operand.vmem [shape: bf16[32,32], index: 3, kind: input, shape index: {}]
  %s4 = inlined_call_operand.vmem [shape: f32[1,32], index: 4, kind: input, shape index: {}]
  %s5 = inlined_call_operand.vmem [shape: bf16[32,128], index: 5, kind: input, shape index: {}]
  %s6 = inlined_call_operand.vmem [shape: f32[1,128], index: 6, kind: input, shape index: {}]
  %s7 = inlined_call_operand.hbm [shape: f32[64,128], index: 7, kind: output, shape index: {}]
  %s8 = sld [smem:[#allocation0]]
  $region61: #{tpu_custom_call.1} parent=0
    _
  %s10 = ssub.s32 1, %s8
  %s11 = scalar_select 0, %s10, %s8
  $region1: #{tpu_custom_call.1} parent=0
    #allocation2 [shape = 'u8[32768]{0}', space=vmem, size = 0x8000, scoped, tag = 'output window, operand 0']
    #allocation3 [shape = 's32[2]{0}', space=sflag, size = 0x8, scoped, tag = 'scoped memory for tpu_custom_call.1']
    %12 = vsyncpa [#allocation3], 0
    %s13 = scalar_lea.sflag [#allocation3], 1
    %14 = vsyncpa %s13, 0
    loop: start=0, step=1, limit=4
    $region2: #{tpu_custom_call.1} parent=1 // loop_pre_header
      _
    $region3: #{tpu_custom_call.1} parent=1 // loop_header
      %s16 = sphi 0, %s20
      %p17 = scmp.ge.s32.totalorder %s16, 4
      %s26 = sphi 0, %s28
      %s29 = sphi 0, %s26
      %s30 = sphi 0, %s29
      %s46 = sphi 0, %s30
      %s50 = sphi 0, %s50
      %s52 = sphi 0, %s50
      %s53 = sphi 0, %s52
      %s67 = sphi 0, %s53
      %s71 = sphi 0, %s71
      %s73 = sphi 0, %s71
      %s74 = sphi 0, %s73
      %s88 = sphi 0, %s74
      %s92 = sphi 0, %s92
      %s94 = sphi 0, %s92
      %s95 = sphi 0, %s94
      %s109 = sphi 0, %s95
      %s113 = sphi 0, %s113
      %s115 = sphi 0, %s113
      %s116 = sphi 0, %s115
      %s130 = sphi 0, %s116
      %s134 = sphi 0, %s134
      %s136 = sphi 0, %s134
      %s137 = sphi 0, %s136
      %s151 = sphi 0, %s137
      %s155 = sphi 0, %s155
      %s157 = sphi 0, %s155
      %s158 = sphi 0, %s157
      %s172 = sphi 0, %s158
      %s178 = sphi 0, %s180
      %s181 = sphi 0, %s178
      %s182 = sphi 0, %s181
      %s198 = sphi 0, %s182
    $region4: #{tpu_custom_call.1} parent=1 // loop_header_branch
      %19 = sbr.rel (%p17) target = $region8
    $region5: #{tpu_custom_call.1} parent=1 // loop_body
      %s21 = ssub.s32 %s16, 1
      %s22 = ssub.s32 %s16, 2
      %s23 = sadd.s32 %s16, 1
      %s24 = ssub.s32 %s16, %s23
      %p25 = scmp.eq.s32.totalorder %s24, 0
      %s27 = sadd.s32 %s26, 1
      %s28 = scalar_select %p25, %s26, %s27
      %p31 = pneg %p25
      %p32 = scmp.eq.s32.totalorder %s16, 1
      %p33 = por %p31, %p32
      %p34 = scmp.ne.s32.totalorder %s26, %s29
      %p35 = scmp.eq.s32.totalorder %s16, 0
      %p36 = por %p34, %p35
      %p37 = scmp.ne.s32.totalorder %s26, %s29
      %p38 = scmp.eq.s32.totalorder %s21, 1
      %p39 = por %p37, %p38
      %p40 = scmp.ne.s32.totalorder %s29, %s30
      %p41 = scmp.eq.s32.totalorder %s21, 0
      %p42 = por %p40, %p41
      %p43 = scmp.ne.s32.totalorder %s29, %s30
      %p44 = scmp.eq.s32.totalorder %s22, 1
      %p45 = por %p43, %p44
      %p47 = scmp.ne.s32.totalorder %s30, %s46
      %p48 = scmp.eq.s32.totalorder %s22, 0
      %p49 = por %p47, %p48
      %s51 = sadd.s32 %s50, 1
      %p54 = scmp.eq.s32.totalorder %s16, 1
      %p55 = scmp.ne.s32.totalorder %s50, %s52
      %p56 = scmp.eq.s32.totalorder %s16, 0
      %p57 = por %p55, %p56
      %p58 = scmp.ne.s32.totalorder %s50, %s52
      %p59 = scmp.eq.s32.totalorder %s21, 1
      %p60 = por %p58, %p59
      %p61 = scmp.ne.s32.totalorder %s52, %s53
      %p62 = scmp.eq.s32.totalorder %s21, 0
      %p63 = por %p61, %p62
      %p64 = scmp.ne.s32.totalorder %s52, %s53
      %p65 = scmp.eq.s32.totalorder %s22, 1
      %p66 = por %p64, %p65
      %p68 = scmp.ne.s32.totalorder %s53, %s67
      %p69 = scmp.eq.s32.totalorder %s22, 0
      %p70 = por %p68, %p69
      %s72 = sadd.s32 %s71, 1
      %p75 = scmp.eq.s32.totalorder %s16, 1
      %p76 = scmp.ne.s32.totalorder %s71, %s73
      %p77 = scmp.eq.s32.totalorder %s16, 0
      %p78 = por %p76, %p77
      %p79 = scmp.ne.s32.totalorder %s71, %s73
      %p80 = scmp.eq.s32.totalorder %s21, 1
      %p81 = por %p79, %p80
      %p82 = scmp.ne.s32.totalorder %s73, %s74
      %p83 = scmp.eq.s32.totalorder %s21, 0
      %p84 = por %p82, %p83
      %p85 = scmp.ne.s32.totalorder %s73, %s74
      %p86 = scmp.eq.s32.totalorder %s22, 1
      %p87 = por %p85, %p86
      %p89 = scmp.ne.s32.totalorder %s74, %s88
      %p90 = scmp.eq.s32.totalorder %s22, 0
      %p91 = por %p89, %p90
      %s93 = sadd.s32 %s92, 1
      %p96 = scmp.eq.s32.totalorder %s16, 1
      %p97 = scmp.ne.s32.totalorder %s92, %s94
      %p98 = scmp.eq.s32.totalorder %s16, 0
      %p99 = por %p97, %p98
      %p100 = scmp.ne.s32.totalorder %s92, %s94
      %p101 = scmp.eq.s32.totalorder %s21, 1
      %p102 = por %p100, %p101
      %p103 = scmp.ne.s32.totalorder %s94, %s95
      %p104 = scmp.eq.s32.totalorder %s21, 0
      %p105 = por %p103, %p104
      %p106 = scmp.ne.s32.totalorder %s94, %s95
      %p107 = scmp.eq.s32.totalorder %s22, 1
      %p108 = por %p106, %p107
      %p110 = scmp.ne.s32.totalorder %s95, %s109
      %p111 = scmp.eq.s32.totalorder %s22, 0
      %p112 = por %p110, %p111
      %s114 = sadd.s32 %s113, 1
      %p117 = scmp.eq.s32.totalorder %s16, 1
      %p118 = scmp.ne.s32.totalorder %s113, %s115
      %p119 = scmp.eq.s32.totalorder %s16, 0
      %p120 = por %p118, %p119
      %p121 = scmp.ne.s32.totalorder %s113, %s115
      %p122 = scmp.eq.s32.totalorder %s21, 1
      %p123 = por %p121, %p122
      %p124 = scmp.ne.s32.totalorder %s115, %s116
      %p125 = scmp.eq.s32.totalorder %s21, 0
      %p126 = por %p124, %p125
      %p127 = scmp.ne.s32.totalorder %s115, %s116
      %p128 = scmp.eq.s32.totalorder %s22, 1
      %p129 = por %p127, %p128
      %p131 = scmp.ne.s32.totalorder %s116, %s130
      %p132 = scmp.eq.s32.totalorder %s22, 0
      %p133 = por %p131, %p132
      %s135 = sadd.s32 %s134, 1
      %p138 = scmp.eq.s32.totalorder %s16, 1
      %p139 = scmp.ne.s32.totalorder %s134, %s136
      %p140 = scmp.eq.s32.totalorder %s16, 0
      %p141 = por %p139, %p140
      %p142 = scmp.ne.s32.totalorder %s134, %s136
      %p143 = scmp.eq.s32.totalorder %s21, 1
      %p144 = por %p142, %p143
      %p145 = scmp.ne.s32.totalorder %s136, %s137
      %p146 = scmp.eq.s32.totalorder %s21, 0
      %p147 = por %p145, %p146
      %p148 = scmp.ne.s32.totalorder %s136, %s137
      %p149 = scmp.eq.s32.totalorder %s22, 1
      %p150 = por %p148, %p149
      %p152 = scmp.ne.s32.totalorder %s137, %s151
      %p153 = scmp.eq.s32.totalorder %s22, 0
      %p154 = por %p152, %p153
      %s156 = sadd.s32 %s155, 1
      %p159 = scmp.eq.s32.totalorder %s16, 1
      %p160 = scmp.ne.s32.totalorder %s155, %s157
      %p161 = scmp.eq.s32.totalorder %s16, 0
      %p162 = por %p160, %p161
      %p163 = scmp.ne.s32.totalorder %s155, %s157
      %p164 = scmp.eq.s32.totalorder %s21, 1
      %p165 = por %p163, %p164
      %p166 = scmp.ne.s32.totalorder %s157, %s158
      %p167 = scmp.eq.s32.totalorder %s21, 0
      %p168 = por %p166, %p167
      %p169 = scmp.ne.s32.totalorder %s157, %s158
      %p170 = scmp.eq.s32.totalorder %s22, 1
      %p171 = por %p169, %p170
      %p173 = scmp.ne.s32.totalorder %s158, %s172
      %p174 = scmp.eq.s32.totalorder %s22, 0
      %p175 = por %p173, %p174
      %s176 = ssub.s32 %s16, %s23
      %p177 = scmp.eq.s32.totalorder %s176, 0
      %s179 = sadd.s32 %s178, 1
      %s180 = scalar_select %p177, %s178, %s179
      %p183 = pneg %p177
      %p184 = scmp.eq.s32.totalorder %s16, 1
      %p185 = por %p183, %p184
      %p186 = scmp.ne.s32.totalorder %s178, %s181
      %p187 = scmp.eq.s32.totalorder %s16, 0
      %p188 = por %p186, %p187
      %p189 = scmp.ne.s32.totalorder %s178, %s181
      %p190 = scmp.eq.s32.totalorder %s21, 1
      %p191 = por %p189, %p190
      %p192 = scmp.ne.s32.totalorder %s181, %s182
      %p193 = scmp.eq.s32.totalorder %s21, 0
      %p194 = por %p192, %p193
      %p195 = scmp.ne.s32.totalorder %s181, %s182
      %p196 = scmp.eq.s32.totalorder %s22, 1
      %p197 = por %p195, %p196
      %p199 = scmp.ne.s32.totalorder %s182, %s198
      %p200 = scmp.eq.s32.totalorder %s22, 0
      %p201 = por %p199, %p200
      %p202 = scmp.le.s32.totalorder 1, %s16
      %p203 = scmp.lt.s32.totalorder %s16, 3
      %p204 = pnand %p202, %p203
      %p205 = pneg %p204
      // Predicated region
      $region9: #{tpu_custom_call.1} parent=5 // pred_check
        _
      $region10: #{tpu_custom_call.1} parent=5 // pred_check_branch
        %207 = sbr.rel (%p204) target = $region12
      $region11: #{tpu_custom_call.1} parent=5 // pred_region
        %s208 = ssub.s32 %s16, 1
        // Predicated region
        $region13: #{tpu_custom_call.1} parent=11 // pred_check
          %p209 = pneg %p63
        $region14: #{tpu_custom_call.1} parent=11 // pred_check_branch
          %211 = sbr.rel (%p209) target = $region16
        $region15: #{tpu_custom_call.1} parent=11 // pred_region
          _
        $region16: #{tpu_custom_call.1} parent=11 // pred_fallthru
          _
        // Predicated region
        $region17: #{tpu_custom_call.1} parent=11 // pred_check
          %p212 = pneg %p84
        $region18: #{tpu_custom_call.1} parent=11 // pred_check_branch
          %214 = sbr.rel (%p212) target = $region20
        $region19: #{tpu_custom_call.1} parent=11 // pred_region
          _
        $region20: #{tpu_custom_call.1} parent=11 // pred_fallthru
          _
        // Predicated region
        $region21: #{tpu_custom_call.1} parent=11 // pred_check
          %p215 = pneg %p105
        $region22: #{tpu_custom_call.1} parent=11 // pred_check_branch
          %217 = sbr.rel (%p215) target = $region24
        $region23: #{tpu_custom_call.1} parent=11 // pred_region
          _
        $region24: #{tpu_custom_call.1} parent=11 // pred_fallthru
          _
        // Predicated region
        $region25: #{tpu_custom_call.1} parent=11 // pred_check
          %p218 = pneg %p126
        $region26: #{tpu_custom_call.1} parent=11 // pred_check_branch
          %220 = sbr.rel (%p218) target = $region28
        $region27: #{tpu_custom_call.1} parent=11 // pred_region
          _
        $region28: #{tpu_custom_call.1} parent=11 // pred_fallthru
          _
        // Predicated region
        $region29: #{tpu_custom_call.1} parent=11 // pred_check
          %p221 = pneg %p147
        $region30: #{tpu_custom_call.1} parent=11 // pred_check_branch
          %223 = sbr.rel (%p221) target = $region32
        $region31: #{tpu_custom_call.1} parent=11 // pred_region
          _
        $region32: #{tpu_custom_call.1} parent=11 // pred_fallthru
          _
        // Predicated region
        $region33: #{tpu_custom_call.1} parent=11 // pred_check
          %p224 = pneg %p168
        $region34: #{tpu_custom_call.1} parent=11 // pred_check_branch
          %226 = sbr.rel (%p224) target = $region36
        $region35: #{tpu_custom_call.1} parent=11 // pred_region
          _
        $region36: #{tpu_custom_call.1} parent=11 // pred_fallthru
          _
      $region12: #{tpu_custom_call.1} parent=5 // pred_fallthru
        _
      %p227 = scmp.lt.s32.totalorder %s16, 2
      // Predicated region
      $region37: #{tpu_custom_call.1} parent=5 // pred_check
        %p228 = pneg %p227
      $region38: #{tpu_custom_call.1} parent=5 // pred_check_branch
        %230 = sbr.rel (%p228) target = $region40
      $region39: #{tpu_custom_call.1} parent=5 // pred_region
        // Predicated region
        $region41: #{tpu_custom_call.1} parent=39 // pred_check
          %p231 = pneg %p36
        $region42: #{tpu_custom_call.1} parent=39 // pred_check_branch
          %233 = sbr.rel (%p231) target = $region44
        $region43: #{tpu_custom_call.1} parent=39 // pred_region
          %s234 = smul.u32 4, %s16
          %p235 = scmp.lt.s32.totalorder %s234, 7
          %s236 = scalar_select %p235, %s234, 7
          %s237 = smul.addr %s236, 8
          %s238 = scalar_lea.vmem %s0, %s237
          %s239 = smul.u32 4, %s16
        $region44: #{tpu_custom_call.1} parent=39 // pred_fallthru
          _
      $region40: #{tpu_custom_call.1} parent=5 // pred_fallthru
        _
      %p240 = scmp.le.s32.totalorder 1, %s16
      %p241 = scmp.lt.s32.totalorder %s16, 3
      %p242 = pnand %p240, %p241
      %p243 = pneg %p242
      // Predicated region
      $region45: #{tpu_custom_call.1} parent=5 // pred_check
        _
      $region46: #{tpu_custom_call.1} parent=5 // pred_check_branch
        %245 = sbr.rel (%p242) target = $region48
      $region47: #{tpu_custom_call.1} parent=5 // pred_region
        %s246 = ssub.s32 %s16, 1
        %s247 = smul.u32 4, %s21
        %p248 = scmp.lt.s32.totalorder %s247, 7
        %s249 = scalar_select %p248, %s247, 7
        %s250 = smul.addr %s249, 8
        %s251 = scalar_lea.vmem %s0, %s250
        %p252 = pneg %p42
        %p253 = pneg %p39
        %p254 = pneg %p63
        %p255 = pneg %p60
        %p256 = pneg %p84
        %p257 = pneg %p81
        %p258 = pneg %p105
        %p259 = pneg %p102
        %p260 = pneg %p126
        %p261 = pneg %p123
        %p262 = pneg %p147
        %p263 = pneg %p144
        %p264 = pneg %p168
        %p265 = pneg %p165
        %p266 = pneg %p194
        %p267 = pneg %p191
        %s268 = sand.u32 %s181, 1
        %s269 = scalar_lea.sflag [#allocation3], %s268
        %s270 = sand.u32 %s181, 1
        %s271 = smul.addr %s270, 32
        %s272 = scalar_lea.vmem [#allocation2], %s271
        %s273 = smul.u32 4, %s21
        %p274 = scmp.lt.s32.totalorder %s273, 7
        %s275 = scalar_select %p274, %s273, 7
        %s276 = smul.addr %s275, 8
        %s277 = scalar_lea.vmem %s0, %s276
        %s278 = smul.u32 4, %s21
        %s279 = smul.u32 4, %s21
        %v281 = vld [vmem:[%s277] sm:$0xff]
        %v282 = vld [vmem:[%s277 + $0x8] sm:$0xff]
        %v283 = vld [vmem:[%s277 + $0x10] sm:$0xff]
        %v284 = vld [vmem:[%s277 + $0x18] sm:$0xff]
        %v285 = vpack.c.bf16 %v282, %v281
        %v286 = vpack.c.bf16 %v284, %v283
        %v287 = vld [vmem:[%s1] sm:$0xf]
        %v288 = vld [vmem:[%s1 + $0x4] sm:$0xf]
        %v289 = vld [vmem:[%s2] sm:$0x1]
        %v291 = vperm.slane %v289, 0
        %v295 = vunpack.c.l.b16 %v287
        %v296 = vunpack.c.l.b16 %v288
        %v297 = vpack.c.b16 %v296, %v295
        %vm299 = vcmask 130048
        %v301 = vsel %vm299, %v285, 0
        %v304 = vsel %vm299, %v286, 0
        %306 = vmatpush.bf16.msra.mxu0 0
        %307 = vmatpush.bf16.msra.mxu0 0
        %308 = vmatpush.bf16.msra.mxu0 0
        %309 = vmatpush.bf16.msra.mxu0 0
        %310 = vmatpush.bf16.msra.mxu0 0
        %311 = vmatpush.bf16.msra.mxu0 0
        %312 = vmatpush.bf16.msra.mxu0 0
        %313 = vmatpush.bf16.msra.mxu0 %v297
        %314 = vmatmul.bf16.gmra.mxu0 %v301
        %v315 = vpop.f32.mrf.mxu0
        %v316 = vadd.f32 %v291, %v315
        %v317 = vpop.f32.mrf.mxu0
        %v318 = vadd.f32 %v291, %v317
        %319 = vmatmul.bf16.gmra.mxu0 %v304
        %v320 = vpop.f32.mrf.mxu0
        %v321 = vadd.f32 %v291, %v320
        %v322 = vpop.f32.mrf.mxu0
        %v323 = vadd.f32 %v291, %v322
        %324 = vdwg.mxu0
        %v325 = vmax.f32 %v316, 0.0
        %v326 = vmax.f32 %v318, 0.0
        %v327 = vmax.f32 %v321, 0.0
        %v328 = vmax.f32 %v323, 0.0
        %v329 = vpack.c.bf16 %v326, %v325
        %v330 = vpack.c.bf16 %v328, %v327
        %v331 = vld [vmem:[%s3] sm:$0xf]
        %v332 = vld [vmem:[%s3 + $0x4] sm:$0xf]
        %v333 = vld [vmem:[%s3 + $0x8] sm:$0xf]
        %v334 = vld [vmem:[%s3 + $0xc] sm:$0xf]
        %v335 = vld [vmem:[%s4] sm:$0x1]
        %v337 = vperm.slane %v335, 0
        %v343 = vunpack.c.l.b16 %v331
        %v344 = vunpack.c.l.b16 %v332
        %v345 = vunpack.c.l.b16 %v333
        %v346 = vunpack.c.l.b16 %v334
        %v347 = vpack.c.b16 %v344, %v343
        %v348 = vpack.c.b16 %v346, %v345
        %vm351 = vcmask 261120
        %v353 = vsel %vm351, %v329, 0
        %v356 = vsel %vm351, %v330, 0
        %358 = vmatpush.bf16.msra.mxu0 0
        %359 = vmatpush.bf16.msra.mxu0 0
        %360 = vmatpush.bf16.msra.mxu0 0
        %361 = vmatpush.bf16.msra.mxu0 0
        %362 = vmatpush.bf16.msra.mxu0 0
        %363 = vmatpush.bf16.msra.mxu0 0
        %364 = vmatpush.bf16.msra.mxu0 %v348
        %365 = vmatpush.bf16.msra.mxu0 %v347
        %366 = vmatmul.bf16.gmra.mxu0 %v353
        %v367 = vpop.f32.mrf.mxu0
        %v368 = vadd.f32 %v337, %v367
        %v369 = vpop.f32.mrf.mxu0
        %v370 = vadd.f32 %v337, %v369
        %371 = vmatmul.bf16.gmra.mxu0 %v356
        %v372 = vpop.f32.mrf.mxu0
        %v373 = vadd.f32 %v337, %v372
        %v374 = vpop.f32.mrf.mxu0
        %v375 = vadd.f32 %v337, %v374
        %376 = vdwg.mxu0
        %v377 = vmax.f32 %v368, 0.0
        %v378 = vmax.f32 %v370, 0.0
        %v379 = vmax.f32 %v373, 0.0
        %v380 = vmax.f32 %v375, 0.0
        %v381 = vpack.c.bf16 %v378, %v377
        %v382 = vpack.c.bf16 %v380, %v379
        %v383 = vld [vmem:[%s5] sm:$0xf]
        %v384 = vld [vmem:[%s5 + $0x4] sm:$0xf]
        %v385 = vld [vmem:[%s5 + $0x8] sm:$0xf]
        %v386 = vld [vmem:[%s5 + $0xc] sm:$0xf]
        %v387 = vld [vmem:[%s6] sm:$0x1]
        %v389 = vperm.slane %v387, 0
        %v395 = vunpack.c.l.b16 %v383
        %v396 = vunpack.c.l.b16 %v384
        %v397 = vunpack.c.l.b16 %v385
        %v398 = vunpack.c.l.b16 %v386
        %v399 = vpack.c.b16 %v396, %v395
        %v400 = vpack.c.b16 %v398, %v397
        %v404 = vsel %vm351, %v381, 0
        %v407 = vsel %vm351, %v382, 0
        %409 = vmatpush.bf16.msra.mxu0 0
        %410 = vmatpush.bf16.msra.mxu0 0
        %411 = vmatpush.bf16.msra.mxu0 0
        %412 = vmatpush.bf16.msra.mxu0 0
        %413 = vmatpush.bf16.msra.mxu0 0
        %414 = vmatpush.bf16.msra.mxu0 0
        %415 = vmatpush.bf16.msra.mxu0 %v400
        %416 = vmatpush.bf16.msra.mxu0 %v399
        %417 = vmatmul.bf16.gmra.mxu0 %v404
        %v418 = vpop.f32.mrf.mxu0
        %v419 = vadd.f32 %v389, %v418
        %v420 = vpop.f32.mrf.mxu0
        %v421 = vadd.f32 %v389, %v420
        %422 = vmatmul.bf16.gmra.mxu0 %v407
        %v423 = vpop.f32.mrf.mxu0
        %v424 = vadd.f32 %v389, %v423
        %v425 = vpop.f32.mrf.mxu0
        %v426 = vadd.f32 %v389, %v425
        %427 = vdwg.mxu0
        %428 = vst [vmem:[%s272] sm:$0xff] %v419
        %429 = vst [vmem:[%s272 + $0x8] sm:$0xff] %v421
        %430 = vst [vmem:[%s272 + $0x10] sm:$0xff] %v424
        %431 = vst [vmem:[%s272 + $0x18] sm:$0xff] %v426
        %s432 = sand.u32 %s181, 1
        %s433 = scalar_lea.sflag [#allocation3], %s432
        %s434 = sand.u32 %s181, 1
        %s435 = smul.addr %s434, 32
        %s436 = scalar_lea.vmem [#allocation2], %s435
        // Predicated region
        $region49: #{tpu_custom_call.1} parent=47 // pred_check
          %p437 = pneg %p191
        $region50: #{tpu_custom_call.1} parent=47 // pred_check_branch
          %439 = sbr.rel (%p437) target = $region52
        $region51: #{tpu_custom_call.1} parent=47 // pred_region
          %s440 = smul.u32 4, %s21
          %442 = vsyncadd %s433, 0
          %s443 = smul.addr %s440, 8
          %s444 = scalar_lea.hbm %s7, %s443
          %s445 = sshll.u32 %s436, 4
          %s446 = int_to_ptr.vmem [resolvable:$true] %s445
          %s447 = sshll.u32 %s444, 4
          %s448 = int_to_ptr.hbm [resolvable:$true] %s447
          %453 = dma.vmem_to_hbm [thread:$0]  %s446, 512, %s448, %s433, 128, 128, 8
        $region52: #{tpu_custom_call.1} parent=47 // pred_fallthru
          _
      $region48: #{tpu_custom_call.1} parent=5 // pred_fallthru
        _
      %p454 = scmp.le.s32.totalorder 2, %s16
      // Predicated region
      $region53: #{tpu_custom_call.1} parent=5 // pred_check
        %p455 = pneg %p454
      $region54: #{tpu_custom_call.1} parent=5 // pred_check_branch
        %457 = sbr.rel (%p455) target = $region56
      $region55: #{tpu_custom_call.1} parent=5 // pred_region
        %s458 = ssub.s32 %s16, 2
        // Predicated region
        $region57: #{tpu_custom_call.1} parent=55 // pred_check
          %p459 = pneg %p197
        $region58: #{tpu_custom_call.1} parent=55 // pred_check_branch
          %461 = sbr.rel (%p459) target = $region60
        $region59: #{tpu_custom_call.1} parent=55 // pred_region
          %s462 = sand.u32 %s182, 1
          %s463 = scalar_lea.sflag [#allocation3], %s462
          %s464 = sand.u32 %s182, 1
          %s465 = smul.addr %s464, 32
          %s466 = scalar_lea.vmem [#allocation2], %s465
          %468 = dma.done %s463, 512
        $region60: #{tpu_custom_call.1} parent=55 // pred_fallthru
          _
      $region56: #{tpu_custom_call.1} parent=5 // pred_fallthru
        _
    $region6: #{tpu_custom_call.1} parent=1 // loop_footer
      %s20 = sadd.s32 1, %s16
    $region7: #{tpu_custom_call.1} parent=1 // loop_footer_branch
      %15 = sbr.rel target = $region3
    $region8: #{tpu_custom_call.1} parent=1 // loop_exit
      _
    %469 = vsyncpa [#allocation3], 1
    %s470 = scalar_lea.sflag [#allocation3], 1
    %471 = vsyncpa %s470, 1

</llo_original>
